<compile_context>
chip_gen: v6e
topology: v6e:2x2x1
jax: 0.10.0
libtpu: 0.0.40
codegen_flags: <defaults>
</compile_context>

<pallas_src>
import functools

import jax
import jax.numpy as jnp
from jax import lax
from jax.experimental import pallas as pl
from jax.experimental.pallas import tpu as pltpu

LANE = 128
SUBLANE = 8
TARGET_TILE_ROWS = 1024  # 1024x128 f32 = 512 KiB per input block (x2 streams x2 bufs = 2 MiB)


def _loss_kernel(x_ref, t_ref, out_ref, acc_bce, acc_int, acc_den, *,
                 n_elems, tile_rows, smooth, bce_weight, needs_mask):
    i = pl.program_id(0)
    last = pl.num_programs(0) - 1

    @pl.when(i == 0)
    def _init():
        acc_bce[...] = jnp.zeros_like(acc_bce)
        acc_int[...] = jnp.zeros_like(acc_int)
        acc_den[...] = jnp.zeros_like(acc_den)

    # Cast on the loaded tile only (inputs stay in their original dtype in HBM).
    x = x_ref[...].astype(jnp.float32)
    t = t_ref[...].astype(jnp.float32)

    # Single transcendental per element, reused for BCE tail and sigmoid.
    e = jnp.exp(-jnp.abs(x))
    # Numerically stable BCE-with-logits (matches torch.nn.BCEWithLogitsLoss).
    bce_el = jnp.maximum(x, 0.0) - x * t + jnp.log1p(e)
    inv_1pe = 1.0 / (1.0 + e)
    sig = jnp.where(x >= 0.0, inv_1pe, e * inv_1pe)

    int_el = sig * t          # intersection contributions
    den_el = sig + t          # folded denominator contributions

    kk = tile_rows // SUBLANE

    def _accumulate(b, s, d):
        acc_bce[...] += b.reshape(kk, SUBLANE, LANE).sum(axis=0)
        acc_int[...] += s.reshape(kk, SUBLANE, LANE).sum(axis=0)
        acc_den[...] += d.reshape(kk, SUBLANE, LANE).sum(axis=0)

    def _finalize():
        # Single cross-lane/sublane reduction, once per call.
        bce_sum = jnp.sum(acc_bce[...])
        inter = jnp.sum(acc_int[...])
        denom = jnp.sum(acc_den[...])

        bce = bce_sum / n_elems
        dice = 1.0 - (2.0 * inter + smooth) / (denom + smooth)
        out_ref[0, 0] = bce_weight * bce + (1.0 - bce_weight) * dice

    if needs_mask:
        @pl.when(i != last)
        def _full_tile():
            _accumulate(bce_el, int_el, den_el)

        @pl.when(i == last)
        def _last_tile_and_finalize():
            # Mask lane padding and any out-of-bounds rows of the final block.
            row = lax.broadcasted_iota(jnp.int32, (tile_rows, LANE), 0)
            lane = lax.broadcasted_iota(jnp.int32, (tile_rows, LANE), 1)
            gidx = (i * tile_rows + row) * LANE + lane
            valid = gidx < n_elems
            zero = jnp.zeros_like(bce_el)
            _accumulate(jnp.where(valid, bce_el, zero),
                        jnp.where(valid, int_el, zero),
                        jnp.where(valid, den_el, zero))
            _finalize()
    else:
        # Aligned case: every tile is full; no mask anywhere in the hot loop.
        _accumulate(bce_el, int_el, den_el)

        @pl.when(i == last)
        def _finalize_only():
            _finalize()


def combined_bce_dice_loss(inputs, targets, *, bce_weight=0.5, smooth=1e-6):
    """JAX/Pallas equivalent of CombinedBCEDiceLoss.forward. Returns a scalar."""
    assert inputs.shape == targets.shape
    n = int(inputs.size)

    x = inputs.reshape(-1)    # keep original dtype
    t = targets.reshape(-1)

    rows = pl.cdiv(n, LANE)
    lane_pad = rows * LANE - n
    if lane_pad:
        # Only pad to the next lane multiple; the tail is masked in-kernel.
        x = jnp.pad(x, (0, lane_pad))
        t = jnp.pad(t, (0, lane_pad))
    x2 = x.reshape(rows, LANE)
    t2 = t.reshape(rows, LANE)

    # Large blocks for HBM roofline; clamp for small inputs (multiple of 8 rows).
    tile_rows = min(TARGET_TILE_ROWS, ((rows + SUBLANE - 1) // SUBLANE) * SUBLANE)
    n_tiles = pl.cdiv(rows, tile_rows)

    # Masking is only needed if there is lane padding or a partial final block.
    needs_mask = (lane_pad != 0) or (rows % tile_rows != 0)

    kernel = functools.partial(
        _loss_kernel,
        n_elems=n,
        tile_rows=tile_rows,
        smooth=float(smooth),
        bce_weight=float(bce_weight),
        needs_mask=bool(needs_mask),
    )

    tile_spec = pl.BlockSpec((tile_rows, LANE), lambda i: (i, 0))

    out = pl.pallas_call(
        kernel,
        out_shape=jax.ShapeDtypeStruct((1, 1), jnp.float32),
        grid_spec=pltpu.PrefetchScalarGridSpec(
            num_scalar_prefetch=0,
            grid=(n_tiles,),
            in_specs=[tile_spec, tile_spec],
            out_specs=pl.BlockSpec((1, 1), lambda i: (0, 0),
                                   memory_space=pltpu.SMEM),
            scratch_shapes=[
                pltpu.VMEM((SUBLANE, LANE), jnp.float32),  # bce partial sums
                pltpu.VMEM((SUBLANE, LANE), jnp.float32),  # intersection
                pltpu.VMEM((SUBLANE, LANE), jnp.float32),  # sig + t
            ],
        ),
        compiler_params=pltpu.CompilerParams(
            dimension_semantics=("arbitrary",),
            vmem_limit_bytes=32 * 1024 * 1024,
        ),
    )(x2, t2)

    return out[0, 0]


def _reference_loss(inputs, targets, bce_weight=0.5, smooth=1e-6):
    x = inputs.astype(jnp.float32).reshape(-1)
    t = targets.astype(jnp.float32).reshape(-1)
    bce_el = jnp.maximum(x, 0.0) - x * t + jnp.log1p(jnp.exp(-jnp.abs(x)))
    bce = jnp.mean(bce_el)
    s = jax.nn.sigmoid(x)
    inter = jnp.sum(s * t)
    dice = 1.0 - (2.0 * inter + smooth) / (jnp.sum(s) + jnp.sum(t) + smooth)
    return bce_weight * bce + (1.0 - bce_weight) * dice


if __name__ == "__main__":
    key = jax.random.PRNGKey(0)
    k1, k2 = jax.random.split(key)
    # Typical segmentation setup: NCHW logits + binary mask (small demo shape).
    x = jax.random.normal(k1, (2, 4, 16, 16), dtype=jnp.float32)
    t = (jax.random.uniform(k2, (2, 4, 16, 16)) > 0.5).astype(jnp.float32)

    loss = combined_bce_dice_loss(x, t, bce_weight=0.5)
    loss = jax.block_until_ready(loss)

    ref = _reference_loss(x, t, bce_weight=0.5)
    assert jnp.allclose(loss, ref, rtol=1e-5, atol=1e-5), (loss, ref)

    # Also exercise a non-lane-aligned size (forces the in-kernel tail mask).
    k3, k4 = jax.random.split(k1)
    x_odd = jax.random.normal(k3, (3, 5, 13), dtype=jnp.float32)
    t_odd = (jax.random.uniform(k4, (3, 5, 13)) > 0.5).astype(jnp.float32)
    loss_odd = jax.block_until_ready(combined_bce_dice_loss(x_odd, t_odd))
    ref_odd = _reference_loss(x_odd, t_odd)
    assert jnp.allclose(loss_odd, ref_odd, rtol=1e-5, atol=1e-5), (loss_odd, ref_odd)

    print("KERNEL_OK")
</pallas_src>

<mosaic_0001>
module attributes {stable_mosaic.version = 11 : i64} {
  func.func @_loss_kernel(%arg0: i32, %arg1: memref<16x128xf32, #tpu.memory_space<vmem>>, %arg2: memref<16x128xf32, #tpu.memory_space<vmem>>, %arg3: memref<1x1xf32, #tpu.memory_space<smem>>, %arg4: memref<8x128xf32, #tpu.memory_space<vmem>>, %arg5: memref<8x128xf32, #tpu.memory_space<vmem>>, %arg6: memref<8x128xf32, #tpu.memory_space<vmem>>) attributes {dimension_semantics = [#tpu.dimension_semantics<arbitrary>], iteration_bounds = array<i64: 1>, scalar_prefetch = 0 : i64, scratch_operands = 3 : i64, tpu.core_type = #tpu.core_type<tc>, window_params = [{transform_indices = @transform_0, window_bounds = array<i64: 16, 128>}, {transform_indices = @transform_1, window_bounds = array<i64: 16, 128>}, {transform_indices = @transform_2, window_bounds = array<i64: 1, 1>}]} {
    %c0_i32 = arith.constant 0 : i32
    %0 = arith.cmpi eq, %arg0, %c0_i32 : i32
    %1 = arith.extui %0 : i1 to i32
    %c0_i32_0 = arith.constant 0 : i32
    %2 = arith.cmpi ne, %1, %c0_i32_0 : i32
    scf.if %2 {
      %cst_25 = arith.constant 0.000000e+00 : f32
      %43 = vector.broadcast %cst_25 : f32 to vector<8x128xf32>
      %c0_26 = arith.constant 0 : index
      %c0_27 = arith.constant 0 : index
      %44 = vector.load %arg4[%c0_26, %c0_27] : memref<8x128xf32, #tpu.memory_space<vmem>>, vector<8x128xf32>
      tpu.vector_store %arg4[%c0_26, %c0_27], %43 {strides = array<i32>} : memref<8x128xf32, #tpu.memory_space<vmem>>, vector<8x128xf32>,
      %cst_28 = arith.constant 0.000000e+00 : f32
      %45 = vector.broadcast %cst_28 : f32 to vector<8x128xf32>
      %c0_29 = arith.constant 0 : index
      %c0_30 = arith.constant 0 : index
      %46 = vector.load %arg5[%c0_29, %c0_30] : memref<8x128xf32, #tpu.memory_space<vmem>>, vector<8x128xf32>
      tpu.vector_store %arg5[%c0_29, %c0_30], %45 {strides = array<i32>} : memref<8x128xf32, #tpu.memory_space<vmem>>, vector<8x128xf32>,
      %cst_31 = arith.constant 0.000000e+00 : f32
      %47 = vector.broadcast %cst_31 : f32 to vector<8x128xf32>
      %c0_32 = arith.constant 0 : index
      %c0_33 = arith.constant 0 : index
      %48 = vector.load %arg6[%c0_32, %c0_33] : memref<8x128xf32, #tpu.memory_space<vmem>>, vector<8x128xf32>
      tpu.vector_store %arg6[%c0_32, %c0_33], %47 {strides = array<i32>} : memref<8x128xf32, #tpu.memory_space<vmem>>, vector<8x128xf32>,
    } else {
    }
    %c0 = arith.constant 0 : index
    %c0_1 = arith.constant 0 : index
    %3 = vector.load %arg1[%c0, %c0_1] : memref<16x128xf32, #tpu.memory_space<vmem>>, vector<16x128xf32>
    %c0_2 = arith.constant 0 : index
    %c0_3 = arith.constant 0 : index
    %4 = vector.load %arg2[%c0_2, %c0_3] : memref<16x128xf32, #tpu.memory_space<vmem>>, vector<16x128xf32>
    %5 = math.absf %3 : vector<16x128xf32>
    %cst = arith.constant 0.000000e+00 : f32
    %6 = vector.broadcast %cst : f32 to vector<16x128xf32>
    %7 = arith.subf %6, %5 : vector<16x128xf32>
    %8 = math.exp %7 : vector<16x128xf32>
    %cst_4 = arith.constant 0.000000e+00 : f32
    %9 = vector.broadcast %cst_4 : f32 to vector<16x128xf32>
    %10 = arith.maximumf %3, %9 : vector<16x128xf32>
    %11 = arith.mulf %3, %4 : vector<16x128xf32>
    %12 = arith.subf %10, %11 : vector<16x128xf32>
    %13 = math.log1p %8 : vector<16x128xf32>
    %14 = arith.addf %12, %13 : vector<16x128xf32>
    %cst_5 = arith.constant 1.000000e+00 : f32
    %15 = vector.broadcast %cst_5 : f32 to vector<16x128xf32>
    %16 = arith.addf %15, %8 : vector<16x128xf32>
    %cst_6 = arith.constant 1.000000e+00 : f32
    %17 = vector.broadcast %cst_6 : f32 to vector<16x128xf32>
    %18 = arith.divf %17, %16 : vector<16x128xf32>
    %cst_7 = arith.constant 0.000000e+00 : f32
    %19 = vector.broadcast %cst_7 : f32 to vector<16x128xf32>
    %20 = arith.cmpf oge, %3, %19 : vector<16x128xf32>
    %21 = arith.mulf %8, %18 : vector<16x128xf32>
    %22 = arith.select %20, %18, %21 : vector<16x128xi1>, vector<16x128xf32>
    %23 = arith.mulf %22, %4 : vector<16x128xf32>
    %24 = arith.addf %22, %4 : vector<16x128xf32>
    %c0_8 = arith.constant 0 : index
    %c0_9 = arith.constant 0 : index
    %25 = vector.load %arg4[%c0_8, %c0_9] : memref<8x128xf32, #tpu.memory_space<vmem>>, vector<8x128xf32>
    %26 = vector.shape_cast %14 : vector<16x128xf32> to vector<2x8x128xf32>
    %cst_10 = arith.constant dense<0.000000e+00> : vector<8x128xf32>
    %27 = vector.multi_reduction <add>, %26, %cst_10 [0] : vector<2x8x128xf32> to vector<8x128xf32>
    %28 = arith.addf %25, %27 : vector<8x128xf32>
    %c0_11 = arith.constant 0 : index
    %c0_12 = arith.constant 0 : index
    %29 = vector.load %arg4[%c0_11, %c0_12] : memref<8x128xf32, #tpu.memory_space<vmem>>, vector<8x128xf32>
    tpu.vector_store %arg4[%c0_11, %c0_12], %28 {strides = array<i32>} : memref<8x128xf32, #tpu.memory_space<vmem>>, vector<8x128xf32>,
    %c0_13 = arith.constant 0 : index
    %c0_14 = arith.constant 0 : index
    %30 = vector.load %arg5[%c0_13, %c0_14] : memref<8x128xf32, #tpu.memory_space<vmem>>, vector<8x128xf32>
    %31 = vector.shape_cast %23 : vector<16x128xf32> to vector<2x8x128xf32>
    %cst_15 = arith.constant dense<0.000000e+00> : vector<8x128xf32>
    %32 = vector.multi_reduction <add>, %31, %cst_15 [0] : vector<2x8x128xf32> to vector<8x128xf32>
    %33 = arith.addf %30, %32 : vector<8x128xf32>
    %c0_16 = arith.constant 0 : index
    %c0_17 = arith.constant 0 : index
    %34 = vector.load %arg5[%c0_16, %c0_17] : memref<8x128xf32, #tpu.memory_space<vmem>>, vector<8x128xf32>
    tpu.vector_store %arg5[%c0_16, %c0_17], %33 {strides = array<i32>} : memref<8x128xf32, #tpu.memory_space<vmem>>, vector<8x128xf32>,
    %c0_18 = arith.constant 0 : index
    %c0_19 = arith.constant 0 : index
    %35 = vector.load %arg6[%c0_18, %c0_19] : memref<8x128xf32, #tpu.memory_space<vmem>>, vector<8x128xf32>
    %36 = vector.shape_cast %24 : vector<16x128xf32> to vector<2x8x128xf32>
    %cst_20 = arith.constant dense<0.000000e+00> : vector<8x128xf32>
    %37 = vector.multi_reduction <add>, %36, %cst_20 [0] : vector<2x8x128xf32> to vector<8x128xf32>
    %38 = arith.addf %35, %37 : vector<8x128xf32>
    %c0_21 = arith.constant 0 : index
    %c0_22 = arith.constant 0 : index
    %39 = vector.load %arg6[%c0_21, %c0_22] : memref<8x128xf32, #tpu.memory_space<vmem>>, vector<8x128xf32>
    tpu.vector_store %arg6[%c0_21, %c0_22], %38 {strides = array<i32>} : memref<8x128xf32, #tpu.memory_space<vmem>>, vector<8x128xf32>,
    %c0_i32_23 = arith.constant 0 : i32
    %40 = arith.cmpi eq, %arg0, %c0_i32_23 : i32
    %41 = arith.extui %40 : i1 to i32
    %c0_i32_24 = arith.constant 0 : i32
    %42 = arith.cmpi ne, %41, %c0_i32_24 : i32
    scf.if %42 {
      %c0_25 = arith.constant 0 : index
      %c0_26 = arith.constant 0 : index
      %43 = vector.load %arg4[%c0_25, %c0_26] : memref<8x128xf32, #tpu.memory_space<vmem>>, vector<8x128xf32>
      %44 = vector.shape_cast %43 : vector<8x128xf32> to vector<1x8x128xf32>
      %cst_27 = arith.constant dense<0.000000e+00> : vector<1xf32>
      %45 = vector.multi_reduction <add>, %44, %cst_27 [1, 2] : vector<1x8x128xf32> to vector<1xf32>
      %46 = vector.shape_cast %45 : vector<1xf32> to vector<1x1x1xf32>
      %47 = vector.extract %46[0, 0, 0] : f32 from vector<1x1x1xf32>
      %c0_28 = arith.constant 0 : index
      %c0_29 = arith.constant 0 : index
      %48 = vector.load %arg5[%c0_28, %c0_29] : memref<8x128xf32, #tpu.memory_space<vmem>>, vector<8x128xf32>
      %49 = vector.shape_cast %48 : vector<8x128xf32> to vector<1x8x128xf32>
      %cst_30 = arith.constant dense<0.000000e+00> : vector<1xf32>
      %50 = vector.multi_reduction <add>, %49, %cst_30 [1, 2] : vector<1x8x128xf32> to vector<1xf32>
      %51 = vector.shape_cast %50 : vector<1xf32> to vector<1x1x1xf32>
      %52 = vector.extract %51[0, 0, 0] : f32 from vector<1x1x1xf32>
      %c0_31 = arith.constant 0 : index
      %c0_32 = arith.constant 0 : index
      %53 = vector.load %arg6[%c0_31, %c0_32] : memref<8x128xf32, #tpu.memory_space<vmem>>, vector<8x128xf32>
      %54 = vector.shape_cast %53 : vector<8x128xf32> to vector<1x8x128xf32>
      %cst_33 = arith.constant dense<0.000000e+00> : vector<1xf32>
      %55 = vector.multi_reduction <add>, %54, %cst_33 [1, 2] : vector<1x8x128xf32> to vector<1xf32>
      %56 = vector.shape_cast %55 : vector<1xf32> to vector<1x1x1xf32>
      %57 = vector.extract %56[0, 0, 0] : f32 from vector<1x1x1xf32>
      %cst_34 = arith.constant 2.048000e+03 : f32
      %58 = arith.divf %47, %cst_34 : f32
      %cst_35 = arith.constant 2.000000e+00 : f32
      %59 = arith.mulf %cst_35, %52 : f32
      %cst_36 = arith.constant 9.99999997E-7 : f32
      %60 = arith.addf %59, %cst_36 : f32
      %cst_37 = arith.constant 9.99999997E-7 : f32
      %61 = arith.addf %57, %cst_37 : f32
      %62 = arith.divf %60, %61 : f32
      %cst_38 = arith.constant 1.000000e+00 : f32
      %63 = arith.subf %cst_38, %62 : f32
      %cst_39 = arith.constant 5.000000e-01 : f32
      %64 = arith.mulf %cst_39, %58 : f32
      %cst_40 = arith.constant 5.000000e-01 : f32
      %65 = arith.mulf %cst_40, %63 : f32
      %66 = arith.addf %64, %65 : f32
      %c0_41 = arith.constant 0 : index
      %c0_42 = arith.constant 0 : index
      %67 = memref.load %arg3[%c0_41, %c0_42] : memref<1x1xf32, #tpu.memory_space<smem>>
      memref.store %66, %arg3[%c0_41, %c0_42] : memref<1x1xf32, #tpu.memory_space<smem>>
    } else {
    }
    return
  }
  func.func @transform_0(%arg0: i32) -> (i32, i32) {
    %c0_i32 = arith.constant 0 : i32
    %c0_i32_0 = arith.constant 0 : i32
    return %arg0, %c0_i32 : i32, i32
  }
  func.func @transform_1(%arg0: i32) -> (i32, i32) {
    %c0_i32 = arith.constant 0 : i32
    %c0_i32_0 = arith.constant 0 : i32
    return %arg0, %c0_i32 : i32, i32
  }
  func.func @transform_2(%arg0: i32) -> (i32, i32) {
    %c0_i32 = arith.constant 0 : i32
    %c0_i32_0 = arith.constant 0 : i32
    %c0_i32_1 = arith.constant 0 : i32
    return %c0_i32, %c0_i32_0 : i32, i32
  }
}

</mosaic_0001>

<llo_original>
// kernel: tpu_custom_call.1
$region0: #{tpu_custom_call.1}
  #allocation0 [shape = 'u32[]', space=smem, size = 0x4, offset = 0x4, fixed_abs, tag = 'smem constant byte address 0x4 - core index']
  #allocation1 [shape = 'u32[144,128]{1,0:T(1,128)}', space=vmem, size = 0x12000, scoped, tag = 'internal scratch']
  #allocation2 [shape = 'f32[8,128]{1,0:T(8,128)}', space=vmem, size = 0x1000, scoped, tag = 'scratch operand']
  #allocation3 [shape = 'f32[8,128]{1,0:T(8,128)}', space=vmem, size = 0x1000, scoped, tag = 'scratch operand']
  #allocation4 [shape = 'f32[8,128]{1,0:T(8,128)}', space=vmem, size = 0x1000, scoped, tag = 'scratch operand']
  %s0 = inlined_call_operand.hbm [shape: f32[16,128], index: 0, kind: input, shape index: {}]
  %s1 = inlined_call_operand.hbm [shape: f32[16,128], index: 1, kind: input, shape index: {}]
  %s2 = inlined_call_operand.hbm [shape: f32[1,1], index: 2, kind: output, shape index: {}]
  %s3 = sld [smem:[#allocation0]]
  $region34: #{tpu_custom_call.1} parent=0
    _
  %s5 = ssub.s32 1, %s3
  %s6 = scalar_select 0, %s5, %s3
  $region1: #{tpu_custom_call.1} parent=0
    #allocation5 [shape = 'u8[8192]{0}', space=vmem, size = 0x2000, scoped, tag = 'input window, operand 0, single buffered']
    #allocation6 [shape = 's32[1]{0}', space=sflag, size = 0x4, scoped, tag = 'scoped memory for tpu_custom_call.1']
    #allocation7 [shape = 's32[1]{0}', space=sflag, size = 0x4, scoped, tag = 'scoped memory for tpu_custom_call.1']
    #allocation8 [shape = 'u8[8192]{0}', space=vmem, size = 0x2000, scoped, tag = 'input window, operand 1, single buffered']
    #allocation9 [shape = 's32[1]{0}', space=sflag, size = 0x4, scoped, tag = 'scoped memory for tpu_custom_call.1']
    #allocation10 [shape = 'u8[512]{0}', space=smem, size = 0x200, scoped, tag = 'output window, operand 0, single buffered']
    %7 = vsyncpa [#allocation6], 0
    %8 = vsyncpa [#allocation9], 0
    %9 = vsyncpa [#allocation7], 0
    // Predicated region
    $region2: #{tpu_custom_call.1} parent=1 // pred_check
      _
    $region3: #{tpu_custom_call.1} parent=1 // pred_check_branch
      %11 = sbr.rel (0) target = $region5
    $region4: #{tpu_custom_call.1} parent=1 // pred_region
      %s13 = ssub.s32 256, 256
      %14 = vsyncadd [#allocation6], %s13
      %s15 = sshll.u32 [#allocation5], 4
      %s16 = int_to_ptr.vmem [resolvable:$true] %s15
      %21 = dma.hbm_to_vmem [thread:$0]  %s0, 256, %s16, [#allocation6], 128, 128, 8
    $region5: #{tpu_custom_call.1} parent=1 // pred_fallthru
      _
    // Predicated region
    $region6: #{tpu_custom_call.1} parent=1 // pred_check
      _
    $region7: #{tpu_custom_call.1} parent=1 // pred_check_branch
      %23 = sbr.rel (0) target = $region9
    $region8: #{tpu_custom_call.1} parent=1 // pred_region
      %s25 = ssub.s32 256, 256
      %26 = vsyncadd [#allocation9], %s25
      %s27 = sshll.u32 [#allocation8], 4
      %s28 = int_to_ptr.vmem [resolvable:$true] %s27
      %33 = dma.hbm_to_vmem [thread:$0]  %s1, 256, %s28, [#allocation9], 128, 128, 8
    $region9: #{tpu_custom_call.1} parent=1 // pred_fallthru
      _
    // Predicated region
    $region10: #{tpu_custom_call.1} parent=1 // pred_check
      _
    $region11: #{tpu_custom_call.1} parent=1 // pred_check_branch
      %35 = sbr.rel (0) target = $region13
    $region12: #{tpu_custom_call.1} parent=1 // pred_region
      %36 = dma.done [#allocation6], 256
    $region13: #{tpu_custom_call.1} parent=1 // pred_fallthru
      _
    // Predicated region
    $region14: #{tpu_custom_call.1} parent=1 // pred_check
      _
    $region15: #{tpu_custom_call.1} parent=1 // pred_check_branch
      %38 = sbr.rel (0) target = $region17
    $region16: #{tpu_custom_call.1} parent=1 // pred_region
      %39 = dma.done [#allocation9], 256
    $region17: #{tpu_custom_call.1} parent=1 // pred_fallthru
      _
    %p40 = scmp.eq.s32.totalorder 0, 0
    // Predicated region
    $region18: #{tpu_custom_call.1} parent=1 // pred_check
      %p41 = pneg %p40
    $region19: #{tpu_custom_call.1} parent=1 // pred_check_branch
      %43 = sbr.rel (%p41) target = $region21
    $region20: #{tpu_custom_call.1} parent=1 // pred_region
      %44 = vst [vmem:[#allocation2] sm:$0xff] 0.0
      %45 = vst [vmem:[#allocation3] sm:$0xff] 0.0
      %46 = vst [vmem:[#allocation4] sm:$0xff] 0.0
    $region21: #{tpu_custom_call.1} parent=1 // pred_fallthru
      _
    %v47 = vld [vmem:[#allocation5] sm:$0xff]
    %v48 = vld [vmem:[#allocation5 + $0x8] sm:$0xff]
    %v49 = vld [vmem:[#allocation8] sm:$0xff]
    %v50 = vld [vmem:[#allocation8 + $0x8] sm:$0xff]
    %v51 = vand.u32 2147483647, %v47
    %v52 = vand.u32 2147483647, %v48
    %v53 = vsub.f32 0.0, %v51
    %v54 = vsub.f32 0.0, %v52
    %v55 = vmul.f32 %v53, 1.442695
    %v56 = vpow.pop %v55
    %v57 = vmul.f32 %v54, 1.442695
    %v58 = vpow.pop %v57
    %v59 = vmax.f32 %v47, 0.0
    %v60 = vmax.f32 %v48, 0.0
    %v61 = vmul.f32 %v47, %v49
    %v62 = vmul.f32 %v48, %v50
    %v63 = vsub.f32 %v59, %v61
    %v64 = vsub.f32 %v60, %v62
    %v65 = vadd.f32 %v56, 1.0
    %v66 = vlog2.pop %v65
    %v67 = vmul.f32 %v66, 0.6931472
    %v68 = vmul.f32 -0.5, %v56
    %v69 = vadd.f32 %v68, 1.0
    %v70 = vmul.f32 %v69, %v56
    %v71 = vand.u32 2147483647, %v56
    %vm72 = vcmp.lt.f32.partialorder %v71, 0.0004427343
    %v73 = vsel %vm72, %v70, %v67
    %v74 = vadd.f32 %v58, 1.0
    %v75 = vlog2.pop %v74
    %v76 = vmul.f32 %v75, 0.6931472
    %v77 = vmul.f32 -0.5, %v58
    %v78 = vadd.f32 %v77, 1.0
    %v79 = vmul.f32 %v78, %v58
    %v80 = vand.u32 2147483647, %v58
    %vm81 = vcmp.lt.f32.partialorder %v80, 0.0004427343
    %v82 = vsel %vm81, %v79, %v76
    %v83 = vadd.f32 %v63, %v73
    %v84 = vadd.f32 %v64, %v82
    %v85 = vadd.f32 %v56, 1.0
    %v86 = vadd.f32 %v58, 1.0
    %v87 = vrcp.pop %v85
    %v88 = vmul.f32 1.0, %v87
    %v89 = vrcp.pop %v86
    %v90 = vmul.f32 1.0, %v89
    %vm91 = vcmp.ge.f32.partialorder %v47, 0.0
    %vm92 = vcmp.ge.f32.partialorder %v48, 0.0
    %v93 = vmul.f32 %v56, %v88
    %v94 = vmul.f32 %v58, %v90
    %v95 = vsel %vm91, %v88, %v93
    %v96 = vsel %vm92, %v90, %v94
    %v97 = vmul.f32 %v95, %v49
    %v98 = vmul.f32 %v96, %v50
    %v99 = vadd.f32 %v95, %v49
    %v100 = vadd.f32 %v96, %v50
    %v101 = vld [vmem:[#allocation2] sm:$0xff]
    %v102 = vadd.f32 %v83, %v84
    %v103 = vadd.f32 %v101, %v102
    %104 = vst [vmem:[#allocation2] sm:$0xff] %v103
    %v105 = vld [vmem:[#allocation3] sm:$0xff]
    %v106 = vadd.f32 %v97, %v98
    %v107 = vadd.f32 %v105, %v106
    %108 = vst [vmem:[#allocation3] sm:$0xff] %v107
    %v109 = vld [vmem:[#allocation4] sm:$0xff]
    %v110 = vadd.f32 %v99, %v100
    %v111 = vadd.f32 %v109, %v110
    %112 = vst [vmem:[#allocation4] sm:$0xff] %v111
    // Predicated region
    $region22: #{tpu_custom_call.1} parent=1 // pred_check
      %p113 = pneg %p40
    $region23: #{tpu_custom_call.1} parent=1 // pred_check_branch
      %115 = sbr.rel (%p113) target = $region25
    $region24: #{tpu_custom_call.1} parent=1 // pred_region
      %v116 = vld [vmem:[#allocation2] sm:$0xff]
      %117 = vadd.xlane.f32.xlu0 %v116
      %v118 = vpop.xlane.xlu0 %117
      %v119 = vrot.slane %v118, 4
      %v120 = vadd.f32 %v118, %v119
      %v121 = vrot.slane %v120, 2
      %v122 = vadd.f32 %v120, %v121
      %v123 = vrot.slane %v122, 1
      %v124 = vadd.f32 %v122, %v123
      %s125 = vtos %v124
      %v126 = vld [vmem:[#allocation3] sm:$0xff]
      %127 = vadd.xlane.f32.xlu0 %v126
      %v128 = vpop.xlane.xlu0 %127
      %v129 = vrot.slane %v128, 4
      %v130 = vadd.f32 %v128, %v129
      %v131 = vrot.slane %v130, 2
      %v132 = vadd.f32 %v130, %v131
      %v133 = vrot.slane %v132, 1
      %v134 = vadd.f32 %v132, %v133
      %s135 = vtos %v134
      %v136 = vld [vmem:[#allocation4] sm:$0xff]
      %137 = vadd.xlane.f32.xlu0 %v136
      %v138 = vpop.xlane.xlu0 %137
      %v139 = vrot.slane %v138, 4
      %v140 = vadd.f32 %v138, %v139
      %v141 = vrot.slane %v140, 2
      %v142 = vadd.f32 %v140, %v141
      %v143 = vrot.slane %v142, 1
      %v144 = vadd.f32 %v142, %v143
      %s145 = vtos %v144
      %v146 = vrcp.pop 2048.0
      %s147 = vtos %v146
      %s148 = smul.f32 %s125, %s147
      %s149 = smul.f32 %s135, 2.0
      %s150 = sadd.f32 %s149, 1e-06
      %s151 = sadd.f32 %s145, 1e-06
      %v152 = vstv %s151
      %v153 = vrcp.pop %v152
      %s154 = vtos %v153
      %s155 = smul.f32 %s150, %s154
      %s156 = ssub.f32 1.0, %s155
      %s157 = smul.f32 %s148, 0.5
      %s158 = smul.f32 %s156, 0.5
      %s159 = sadd.f32 %s157, %s158
      %s160 = scalar_lea.smem [#allocation10], 0
      %161 = sst [smem:[%s160]] %s159
    $region25: #{tpu_custom_call.1} parent=1 // pred_fallthru
      _
    // Predicated region
    $region26: #{tpu_custom_call.1} parent=1 // pred_check
      _
    $region27: #{tpu_custom_call.1} parent=1 // pred_check_branch
      %163 = sbr.rel (0) target = $region29
    $region28: #{tpu_custom_call.1} parent=1 // pred_region
      %s165 = ssub.s32 16, 16
      %166 = vsyncadd [#allocation7], %s165
      %169 = dma.smem_to_hbm [#allocation10], 16, %s2, [#allocation7]
    $region29: #{tpu_custom_call.1} parent=1 // pred_fallthru
      _
    // Predicated region
    $region30: #{tpu_custom_call.1} parent=1 // pred_check
      _
    $region31: #{tpu_custom_call.1} parent=1 // pred_check_branch
      %171 = sbr.rel (0) target = $region33
    $region32: #{tpu_custom_call.1} parent=1 // pred_region
      %172 = dma.done [#allocation7], 16
    $region33: #{tpu_custom_call.1} parent=1 // pred_fallthru
      _
    %173 = sfence
    %174 = vsyncpa [#allocation6], 1
    %175 = vsyncpa [#allocation9], 1
    %176 = vsyncpa [#allocation7], 1

</llo_original>
